<compile_context>
chip_gen: v6e
topology: v6e:2x2x1
jax: 0.10.0
libtpu: 0.0.40
codegen_flags: <defaults>
</compile_context>

<pallas_src>
import functools

import jax
import jax.numpy as jnp
from jax.experimental import pallas as pl
from jax.experimental.pallas import tpu as pltpu

N_EMBD = 384        # n_embd from the module
BLOCK_SIZE = 256    # max sequence length (tril buffer size); T <= BLOCK_SIZE
DROPOUT_P = 0.2     # dropout from the module


def _head_kernel(x_ref, wqkv_ref, o_ref, *, scale, head_size, training, seed):
    # x_ref block: (Bb, T, C); wqkv_ref block: (C, 3H); o_ref block: (Bb, T, H)
    Bb, T, C = x_ref.shape
    H = head_size

    x = x_ref[...]                                   # (Bb, T, C) f32
    w = wqkv_ref[...]                                # (C, 3H)

    # ---- Fused QKV projection: one lane-dense MXU pass in bf16, f32 accum ----
    x2 = x.reshape(Bb * T, C).astype(jnp.bfloat16)
    wb = w.astype(jnp.bfloat16)
    qkv = jnp.dot(x2, wb, preferred_element_type=jnp.float32)   # (Bb*T, 3H)
    qkv = qkv.reshape(Bb, T, 3 * H)

    # Scale q (T*H elems) instead of wei (T*T elems); matches wei * C**-0.5.
    q = qkv[:, :, 0 * H:1 * H] * scale               # (Bb, T, H) f32
    k = qkv[:, :, 1 * H:2 * H]
    v = qkv[:, :, 2 * H:3 * H]

    # ---- Attention scores: contract last axis of q vs last axis of k --------
    wei = jnp.einsum('bqh,bkh->bqk',
                     q.astype(jnp.bfloat16), k.astype(jnp.bfloat16),
                     preferred_element_type=jnp.float32)        # (Bb, T, T)

    # Causal (tril) mask: col > row -> -inf (every row keeps its diagonal).
    row = jax.lax.broadcasted_iota(jnp.int32, wei.shape, 1)
    col = jax.lax.broadcasted_iota(jnp.int32, wei.shape, 2)
    wei = jnp.where(col <= row, wei, -jnp.inf)

    # ---- Softmax (f32 math; reciprocal on the EUP) ---------------------------
    wei = wei - jnp.max(wei, axis=-1, keepdims=True)
    e = jnp.exp(wei)
    p = e * pl.reciprocal(jnp.sum(e, axis=-1, keepdims=True), approx=True)

    if training:
        # Inverted dropout on attention weights via the TPU hardware PRNG.
        # Integer-threshold compare on the raw bits (no float conversion).
        # TODO(synk): does not bit-match torch.nn.Dropout's RNG stream.
        pltpu.prng_seed(seed + pl.program_id(0))
        bits = pltpu.bitcast(pltpu.prng_random_bits(p.shape), jnp.uint32)
        threshold = jnp.uint32(int(DROPOUT_P * (1 << 32)))
        keep = bits >= threshold
        p = jnp.where(keep, p * (1.0 / (1.0 - DROPOUT_P)), 0.0)

    # ---- Weighted aggregation of values (bf16 MXU, f32 accum) ---------------
    out = jnp.einsum('bqk,bkh->bqh',
                     p.astype(jnp.bfloat16), v.astype(jnp.bfloat16),
                     preferred_element_type=jnp.float32)        # (Bb, T, H)
    o_ref[...] = out.astype(o_ref.dtype)


def _pick_block_batch(B, cap=8):
    """Largest divisor of B that is <= cap (batch rows per grid step)."""
    bb = 1
    for d in range(2, min(B, cap) + 1):
        if B % d == 0:
            bb = d
    return bb


def head_forward(x, wk, wq, wv, *, training=False, seed=0):
    """x: (B, T, C) f32; wk/wq/wv: (C, H) f32 (pre-transposed Linear weights).

    Returns (B, T, H)."""
    B, T, C = x.shape
    H = wk.shape[1]
    assert T <= BLOCK_SIZE and C == N_EMBD
    scale = float(C) ** -0.5                 # matches the module: wei * C**-0.5

    # Pack the three projection weights into one (C, 3H) slab: [q | k | v].
    w_qkv = jnp.concatenate([wq, wk, wv], axis=1)

    Bb = _pick_block_batch(B)
    kernel = functools.partial(_head_kernel, scale=scale, head_size=H,
                               training=training, seed=seed)

    return pl.pallas_call(
        kernel,
        out_shape=jax.ShapeDtypeStruct((B, T, H), x.dtype),
        grid_spec=pltpu.PrefetchScalarGridSpec(
            num_scalar_prefetch=0,
            grid=(B // Bb,),
            in_specs=[
                pl.BlockSpec((Bb, T, C), lambda b: (b, 0, 0)),     # x slab
                pl.BlockSpec((C, 3 * H), lambda b: (0, 0)),        # fused W_qkv
            ],
            out_specs=pl.BlockSpec((Bb, T, H), lambda b: (b, 0, 0)),
        ),
        compiler_params=pltpu.CompilerParams(
            dimension_semantics=("parallel",)),
    )(x, w_qkv)


def head_reference(x, wk, wq, wv):
    """Pure-JAX f32 reference (eval mode: dropout is identity)."""
    B, T, C = x.shape
    k = x @ wk
    q = x @ wq
    v = x @ wv
    wei = (q @ jnp.swapaxes(k, -2, -1)) * (C ** -0.5)
    mask = jnp.tril(jnp.ones((T, T), dtype=bool))
    wei = jnp.where(mask, wei, -jnp.inf)
    wei = jax.nn.softmax(wei, axis=-1)
    return wei @ v


if __name__ == "__main__":
    B, T, H = 2, 16, 64   # small batch / seq; C = n_embd = 384, head_size = 64

    key = jax.random.PRNGKey(0)
    kx, kk, kq, kv = jax.random.split(key, 4)

    x = jax.random.normal(kx, (B, T, N_EMBD), dtype=jnp.float32)
    # nn.Linear-style init: U(-1/sqrt(fan_in), 1/sqrt(fan_in)), stored (C, H).
    bound = 1.0 / (N_EMBD ** 0.5)
    wk = jax.random.uniform(kk, (N_EMBD, H), jnp.float32, -bound, bound)
    wq = jax.random.uniform(kq, (N_EMBD, H), jnp.float32, -bound, bound)
    wv = jax.random.uniform(kv, (N_EMBD, H), jnp.float32, -bound, bound)

    # Eval mode (dropout identity), matching model.eval().
    out = head_forward(x, wk, wq, wv, training=False)
    out = jax.block_until_ready(out)

    # Correctness vs f32 reference; tolerance loosened for bf16 MXU matmuls.
    ref = head_reference(x, wk, wq, wv)
    assert out.shape == (B, T, H)
    assert jnp.allclose(out, ref, atol=3e-2, rtol=3e-2), (
        "mismatch vs reference; max abs diff = %f" % float(jnp.max(jnp.abs(out - ref))))

    print("KERNEL_OK")
</pallas_src>

<mosaic_0001>
module attributes {stable_mosaic.version = 11 : i64} {
  func.func @_head_kernel(%arg0: i32, %arg1: memref<2x16x384xf32, #tpu.memory_space<vmem>>, %arg2: memref<384x192xf32, #tpu.memory_space<vmem>>, %arg3: memref<2x16x64xf32, #tpu.memory_space<vmem>>) attributes {dimension_semantics = [#tpu.dimension_semantics<parallel>], iteration_bounds = array<i64: 1>, scalar_prefetch = 0 : i64, scratch_operands = 0 : i64, tpu.core_type = #tpu.core_type<tc>, window_params = [{transform_indices = @transform_0, window_bounds = array<i64: 2, 16, 384>}, {pipeline_mode = #tpu.pipeline_mode<synchronous>, transform_indices = @transform_1, window_bounds = array<i64: 384, 192>}, {transform_indices = @transform_2, window_bounds = array<i64: 2, 16, 64>}]} {
    %c0 = arith.constant 0 : index
    %c0_0 = arith.constant 0 : index
    %c0_1 = arith.constant 0 : index
    %0 = vector.load %arg1[%c0, %c0_0, %c0_1] : memref<2x16x384xf32, #tpu.memory_space<vmem>>, vector<2x16x384xf32>
    %c0_2 = arith.constant 0 : index
    %c0_3 = arith.constant 0 : index
    %1 = vector.load %arg2[%c0_2, %c0_3] : memref<384x192xf32, #tpu.memory_space<vmem>>, vector<384x192xf32>
    %2 = vector.shape_cast %0 : vector<2x16x384xf32> to vector<32x384xf32>
    %3 = arith.truncf %2 : vector<32x384xf32> to vector<32x384xbf16>
    %4 = arith.truncf %1 : vector<384x192xf32> to vector<384x192xbf16>
    %cst = arith.constant dense<0.000000e+00> : vector<32x192xf32>
    %5 = tpu.matmul %3, %4, %cst {dimension_numbers = #tpu.dot_dimension_numbers<[1], [0], [0], [1], [0, 0, 1, 1], [], []>} : vector<32x384xbf16>, vector<384x192xbf16>, vector<32x192xf32> -> vector<32x192xf32>
    %6 = vector.shape_cast %5 : vector<32x192xf32> to vector<2x16x192xf32>
    %7 = vector.extract_strided_slice %6 {offsets = [0, 0, 0], sizes = [2, 16, 64], strides = [1, 1, 1]} : vector<2x16x192xf32> to vector<2x16x64xf32>
    %cst_4 = arith.constant 0.0510310382 : f32
    %8 = vector.broadcast %cst_4 : f32 to vector<2x16x64xf32>
    %9 = arith.mulf %7, %8 : vector<2x16x64xf32>
    %10 = vector.extract_strided_slice %6 {offsets = [0, 0, 64], sizes = [2, 16, 64], strides = [1, 1, 1]} : vector<2x16x192xf32> to vector<2x16x64xf32>
    %11 = vector.extract_strided_slice %6 {offsets = [0, 0, 128], sizes = [2, 16, 64], strides = [1, 1, 1]} : vector<2x16x192xf32> to vector<2x16x64xf32>
    %12 = arith.truncf %9 : vector<2x16x64xf32> to vector<2x16x64xbf16>
    %13 = arith.truncf %10 : vector<2x16x64xf32> to vector<2x16x64xbf16>
    "tpu.trace_start"() <{level = 10 : i32, message = "bqh,bkh->bqk"}> : () -> ()
    %cst_5 = arith.constant dense<0.000000e+00> : vector<2x16x16xf32>
    %14 = tpu.matmul %12, %13, %cst_5 {dimension_numbers = #tpu.dot_dimension_numbers<[2], [2], [1], [1], [0, 0, 0, 1, 1, 1], [0], [0]>} : vector<2x16x64xbf16>, vector<2x16x64xbf16>, vector<2x16x16xf32> -> vector<2x16x16xf32>
    "tpu.trace_stop"() : () -> ()
    %15 = tpu.iota {dimensions = array<i32: 1>} : vector<2x16x16xi32>
    %16 = tpu.iota {dimensions = array<i32: 2>} : vector<2x16x16xi32>
    %17 = arith.cmpi sle, %16, %15 : vector<2x16x16xi32>
    %cst_6 = arith.constant 0xFF800000 : f32
    %18 = vector.broadcast %cst_6 : f32 to vector<2x16x16xf32>
    %19 = arith.select %17, %14, %18 : vector<2x16x16xi1>, vector<2x16x16xf32>
    %cst_7 = arith.constant dense<0xFF800000> : vector<2x16xf32>
    %20 = vector.multi_reduction <maximumf>, %19, %cst_7 [2] : vector<2x16x16xf32> to vector<2x16xf32>
    %21 = vector.shape_cast %20 : vector<2x16xf32> to vector<2x16x1xf32>
    %22 = vector.broadcast %21 : vector<2x16x1xf32> to vector<2x16x16xf32>
    %23 = arith.subf %19, %22 : vector<2x16x16xf32>
    %24 = math.exp %23 : vector<2x16x16xf32>
    %cst_8 = arith.constant dense<0.000000e+00> : vector<2x16xf32>
    %25 = vector.multi_reduction <add>, %24, %cst_8 [2] : vector<2x16x16xf32> to vector<2x16xf32>
    %26 = vector.shape_cast %25 : vector<2x16xf32> to vector<2x16x1xf32>
    %27 = tpu.reciprocal %26 {approx = true} : vector<2x16x1xf32> -> vector<2x16x1xf32>
    %28 = vector.broadcast %27 : vector<2x16x1xf32> to vector<2x16x16xf32>
    %29 = arith.mulf %24, %28 : vector<2x16x16xf32>
    %30 = arith.truncf %29 : vector<2x16x16xf32> to vector<2x16x16xbf16>
    %31 = arith.truncf %11 : vector<2x16x64xf32> to vector<2x16x64xbf16>
    "tpu.trace_start"() <{level = 10 : i32, message = "bqk,bkh->bqh"}> : () -> ()
    %cst_9 = arith.constant dense<0.000000e+00> : vector<2x16x64xf32>
    %32 = tpu.matmul %30, %31, %cst_9 {dimension_numbers = #tpu.dot_dimension_numbers<[2], [1], [1], [2], [0, 0, 0, 1, 1, 2], [0], [0]>} : vector<2x16x16xbf16>, vector<2x16x64xbf16>, vector<2x16x64xf32> -> vector<2x16x64xf32>
    "tpu.trace_stop"() : () -> ()
    %c0_10 = arith.constant 0 : index
    %c0_11 = arith.constant 0 : index
    %c0_12 = arith.constant 0 : index
    %33 = vector.load %arg3[%c0_10, %c0_11, %c0_12] : memref<2x16x64xf32, #tpu.memory_space<vmem>>, vector<2x16x64xf32>
    tpu.vector_store %arg3[%c0_10, %c0_11, %c0_12], %32 {strides = array<i32>} : memref<2x16x64xf32, #tpu.memory_space<vmem>>, vector<2x16x64xf32>,
    return
  }
  func.func @transform_0(%arg0: i32) -> (i32, i32, i32) {
    %c0_i32 = arith.constant 0 : i32
    %c0_i32_0 = arith.constant 0 : i32
    %c0_i32_1 = arith.constant 0 : i32
    return %arg0, %c0_i32, %c0_i32_0 : i32, i32, i32
  }
  func.func @transform_1(%arg0: i32) -> (i32, i32) {
    %c0_i32 = arith.constant 0 : i32
    %c0_i32_0 = arith.constant 0 : i32
    %c0_i32_1 = arith.constant 0 : i32
    return %c0_i32, %c0_i32_0 : i32, i32
  }
  func.func @transform_2(%arg0: i32) -> (i32, i32, i32) {
    %c0_i32 = arith.constant 0 : i32
    %c0_i32_0 = arith.constant 0 : i32
    %c0_i32_1 = arith.constant 0 : i32
    return %arg0, %c0_i32, %c0_i32_0 : i32, i32, i32
  }
}

</mosaic_0001>

<llo_original>
// kernel: tpu_custom_call.1
$region0: #{tpu_custom_call.1}
  #allocation0 [shape = 'u32[]', space=smem, size = 0x4, offset = 0x4, fixed_abs, tag = 'smem constant byte address 0x4 - core index']
  #allocation1 [shape = 'u32[144,128]{1,0:T(1,128)}', space=vmem, size = 0x12000, scoped, tag = 'internal scratch']
  %s0 = inlined_call_operand.vmem [shape: f32[2,16,384], index: 0, kind: input, shape index: {}]
  %s1 = inlined_call_operand.vmem [shape: f32[384,192], index: 1, kind: input, shape index: {}]
  %s2 = inlined_call_operand.hbm [shape: f32[2,16,64], index: 2, kind: output, shape index: {}]
  %s3 = sld [smem:[#allocation0]]
  $region18: #{tpu_custom_call.1} parent=0
    _
  %s5 = ssub.s32 1, %s3
  %s6 = scalar_select 0, %s5, %s3
  $region1: #{tpu_custom_call.1} parent=0
    #allocation2 [shape = 'u8[16384]{0}', space=vmem, size = 0x4000, scoped, tag = 'output window, operand 0, single buffered']
    #allocation3 [shape = 's32[1]{0}', space=sflag, size = 0x4, scoped, tag = 'scoped memory for tpu_custom_call.1']
    %7 = vsyncpa [#allocation3], 0
    // Predicated region
    $region2: #{tpu_custom_call.1} parent=1 // pred_check
      _
    $region3: #{tpu_custom_call.1} parent=1 // pred_check_branch
      %9 = sbr.rel (0) target = $region5
    $region4: #{tpu_custom_call.1} parent=1 // pred_region
      _
    $region5: #{tpu_custom_call.1} parent=1 // pred_fallthru
      _
    // Predicated region
    $region6: #{tpu_custom_call.1} parent=1 // pred_check
      _
    $region7: #{tpu_custom_call.1} parent=1 // pred_check_branch
      %11 = sbr.rel (0) target = $region9
    $region8: #{tpu_custom_call.1} parent=1 // pred_region
      _
    $region9: #{tpu_custom_call.1} parent=1 // pred_fallthru
      _
    %v13 = vld [vmem:[%s0] sm:$0xff]
    %v14 = vld [vmem:[%s0 + $0x8] sm:$0xff]
    %v15 = vld [vmem:[%s0 + $0x10] sm:$0xff]
    %v16 = vld [vmem:[%s0 + $0x18] sm:$0xff]
    %v17 = vld [vmem:[%s0 + $0x20] sm:$0xff]
    %v18 = vld [vmem:[%s0 + $0x28] sm:$0xff]
    %v19 = vld [vmem:[%s0 + $0x30] sm:$0xff]
    %v20 = vld [vmem:[%s0 + $0x38] sm:$0xff]
    %v21 = vld [vmem:[%s0 + $0x40] sm:$0xff]
    %v22 = vld [vmem:[%s0 + $0x48] sm:$0xff]
    %v23 = vld [vmem:[%s0 + $0x50] sm:$0xff]
    %v24 = vld [vmem:[%s0 + $0x58] sm:$0xff]
    %v25 = vld [vmem:[%s1] sm:$0xff]
    %v26 = vld [vmem:[%s1 + $0x8] sm:$0xff]
    %v27 = vld [vmem:[%s1 + $0x10] sm:$0xff]
    %v28 = vld [vmem:[%s1 + $0x18] sm:$0xff]
    %v29 = vld [vmem:[%s1 + $0x20] sm:$0xff]
    %v30 = vld [vmem:[%s1 + $0x28] sm:$0xff]
    %v31 = vld [vmem:[%s1 + $0x30] sm:$0xff]
    %v32 = vld [vmem:[%s1 + $0x38] sm:$0xff]
    %v33 = vld [vmem:[%s1 + $0x40] sm:$0xff]
    %v34 = vld [vmem:[%s1 + $0x48] sm:$0xff]
    %v35 = vld [vmem:[%s1 + $0x50] sm:$0xff]
    %v36 = vld [vmem:[%s1 + $0x58] sm:$0xff]
    %v37 = vld [vmem:[%s1 + $0x60] sm:$0xff]
    %v38 = vld [vmem:[%s1 + $0x68] sm:$0xff]
    %v39 = vld [vmem:[%s1 + $0x70] sm:$0xff]
    %v40 = vld [vmem:[%s1 + $0x78] sm:$0xff]
    %v41 = vld [vmem:[%s1 + $0x80] sm:$0xff]
    %v42 = vld [vmem:[%s1 + $0x88] sm:$0xff]
    %v43 = vld [vmem:[%s1 + $0x90] sm:$0xff]
    %v44 = vld [vmem:[%s1 + $0x98] sm:$0xff]
    %v45 = vld [vmem:[%s1 + $0xa0] sm:$0xff]
    %v46 = vld [vmem:[%s1 + $0xa8] sm:$0xff]
    %v47 = vld [vmem:[%s1 + $0xb0] sm:$0xff]
    %v48 = vld [vmem:[%s1 + $0xb8] sm:$0xff]
    %v49 = vld [vmem:[%s1 + $0xc0] sm:$0xff]
    %v50 = vld [vmem:[%s1 + $0xc8] sm:$0xff]
    %v51 = vld [vmem:[%s1 + $0xd0] sm:$0xff]
    %v52 = vld [vmem:[%s1 + $0xd8] sm:$0xff]
    %v53 = vld [vmem:[%s1 + $0xe0] sm:$0xff]
    %v54 = vld [vmem:[%s1 + $0xe8] sm:$0xff]
    %v55 = vld [vmem:[%s1 + $0xf0] sm:$0xff]
    %v56 = vld [vmem:[%s1 + $0xf8] sm:$0xff]
    %v57 = vld [vmem:[%s1 + $0x100] sm:$0xff]
    %v58 = vld [vmem:[%s1 + $0x108] sm:$0xff]
    %v59 = vld [vmem:[%s1 + $0x110] sm:$0xff]
    %v60 = vld [vmem:[%s1 + $0x118] sm:$0xff]
    %v61 = vld [vmem:[%s1 + $0x120] sm:$0xff]
    %v62 = vld [vmem:[%s1 + $0x128] sm:$0xff]
    %v63 = vld [vmem:[%s1 + $0x130] sm:$0xff]
    %v64 = vld [vmem:[%s1 + $0x138] sm:$0xff]
    %v65 = vld [vmem:[%s1 + $0x140] sm:$0xff]
    %v66 = vld [vmem:[%s1 + $0x148] sm:$0xff]
    %v67 = vld [vmem:[%s1 + $0x150] sm:$0xff]
    %v68 = vld [vmem:[%s1 + $0x158] sm:$0xff]
    %v69 = vld [vmem:[%s1 + $0x160] sm:$0xff]
    %v70 = vld [vmem:[%s1 + $0x168] sm:$0xff]
    %v71 = vld [vmem:[%s1 + $0x170] sm:$0xff]
    %v72 = vld [vmem:[%s1 + $0x178] sm:$0xff]
    %v73 = vld [vmem:[%s1 + $0x180] sm:$0xff]
    %v74 = vld [vmem:[%s1 + $0x188] sm:$0xff]
    %v75 = vld [vmem:[%s1 + $0x190] sm:$0xff]
    %v76 = vld [vmem:[%s1 + $0x198] sm:$0xff]
    %v77 = vld [vmem:[%s1 + $0x1a0] sm:$0xff]
    %v78 = vld [vmem:[%s1 + $0x1a8] sm:$0xff]
    %v79 = vld [vmem:[%s1 + $0x1b0] sm:$0xff]
    %v80 = vld [vmem:[%s1 + $0x1b8] sm:$0xff]
    %v81 = vld [vmem:[%s1 + $0x1c0] sm:$0xff]
    %v82 = vld [vmem:[%s1 + $0x1c8] sm:$0xff]
    %v83 = vld [vmem:[%s1 + $0x1d0] sm:$0xff]
    %v84 = vld [vmem:[%s1 + $0x1d8] sm:$0xff]
    %v85 = vld [vmem:[%s1 + $0x1e0] sm:$0xff]
    %v86 = vld [vmem:[%s1 + $0x1e8] sm:$0xff]
    %v87 = vld [vmem:[%s1 + $0x1f0] sm:$0xff]
    %v88 = vld [vmem:[%s1 + $0x1f8] sm:$0xff]
    %v89 = vld [vmem:[%s1 + $0x200] sm:$0xff]
    %v90 = vld [vmem:[%s1 + $0x208] sm:$0xff]
    %v91 = vld [vmem:[%s1 + $0x210] sm:$0xff]
    %v92 = vld [vmem:[%s1 + $0x218] sm:$0xff]
    %v93 = vld [vmem:[%s1 + $0x220] sm:$0xff]
    %v94 = vld [vmem:[%s1 + $0x228] sm:$0xff]
    %v95 = vld [vmem:[%s1 + $0x230] sm:$0xff]
    %v96 = vld [vmem:[%s1 + $0x238] sm:$0xff]
    %v97 = vld [vmem:[%s1 + $0x240] sm:$0xff]
    %v98 = vld [vmem:[%s1 + $0x248] sm:$0xff]
    %v99 = vld [vmem:[%s1 + $0x250] sm:$0xff]
    %v100 = vld [vmem:[%s1 + $0x258] sm:$0xff]
    %v101 = vld [vmem:[%s1 + $0x260] sm:$0xff]
    %v102 = vld [vmem:[%s1 + $0x268] sm:$0xff]
    %v103 = vld [vmem:[%s1 + $0x270] sm:$0xff]
    %v104 = vld [vmem:[%s1 + $0x278] sm:$0xff]
    %v105 = vld [vmem:[%s1 + $0x280] sm:$0xff]
    %v106 = vld [vmem:[%s1 + $0x288] sm:$0xff]
    %v107 = vld [vmem:[%s1 + $0x290] sm:$0xff]
    %v108 = vld [vmem:[%s1 + $0x298] sm:$0xff]
    %v109 = vld [vmem:[%s1 + $0x2a0] sm:$0xff]
    %v110 = vld [vmem:[%s1 + $0x2a8] sm:$0xff]
    %v111 = vld [vmem:[%s1 + $0x2b0] sm:$0xff]
    %v112 = vld [vmem:[%s1 + $0x2b8] sm:$0xff]
    %v113 = vld [vmem:[%s1 + $0x2c0] sm:$0xff]
    %v114 = vld [vmem:[%s1 + $0x2c8] sm:$0xff]
    %v115 = vld [vmem:[%s1 + $0x2d0] sm:$0xff]
    %v116 = vld [vmem:[%s1 + $0x2d8] sm:$0xff]
    %v117 = vld [vmem:[%s1 + $0x2e0] sm:$0xff]
    %v118 = vld [vmem:[%s1 + $0x2e8] sm:$0xff]
    %v119 = vld [vmem:[%s1 + $0x2f0] sm:$0xff]
    %v120 = vld [vmem:[%s1 + $0x2f8] sm:$0xff]
    %v121 = vpack.c.bf16 %v16, %v13
    %v122 = vpack.c.bf16 %v17, %v14
    %v123 = vpack.c.bf16 %v18, %v15
    %v124 = vpack.c.bf16 %v22, %v19
    %v125 = vpack.c.bf16 %v23, %v20
    %v126 = vpack.c.bf16 %v24, %v21
    %v127 = vpack.c.bf16 %v27, %v25
    %v128 = vpack.c.bf16 %v28, %v26
    %v129 = vpack.c.bf16 %v31, %v29
    %v130 = vpack.c.bf16 %v32, %v30
    %v131 = vpack.c.bf16 %v35, %v33
    %v132 = vpack.c.bf16 %v36, %v34
    %v133 = vpack.c.bf16 %v39, %v37
    %v134 = vpack.c.bf16 %v40, %v38
    %v135 = vpack.c.bf16 %v43, %v41
    %v136 = vpack.c.bf16 %v44, %v42
    %v137 = vpack.c.bf16 %v47, %v45
    %v138 = vpack.c.bf16 %v48, %v46
    %v139 = vpack.c.bf16 %v51, %v49
    %v140 = vpack.c.bf16 %v52, %v50
    %v141 = vpack.c.bf16 %v55, %v53
    %v142 = vpack.c.bf16 %v56, %v54
    %v143 = vpack.c.bf16 %v59, %v57
    %v144 = vpack.c.bf16 %v60, %v58
    %v145 = vpack.c.bf16 %v63, %v61
    %v146 = vpack.c.bf16 %v64, %v62
    %v147 = vpack.c.bf16 %v67, %v65
    %v148 = vpack.c.bf16 %v68, %v66
    %v149 = vpack.c.bf16 %v71, %v69
    %v150 = vpack.c.bf16 %v72, %v70
    %v151 = vpack.c.bf16 %v75, %v73
    %v152 = vpack.c.bf16 %v76, %v74
    %v153 = vpack.c.bf16 %v79, %v77
    %v154 = vpack.c.bf16 %v80, %v78
    %v155 = vpack.c.bf16 %v83, %v81
    %v156 = vpack.c.bf16 %v84, %v82
    %v157 = vpack.c.bf16 %v87, %v85
    %v158 = vpack.c.bf16 %v88, %v86
    %v159 = vpack.c.bf16 %v91, %v89
    %v160 = vpack.c.bf16 %v92, %v90
    %v161 = vpack.c.bf16 %v95, %v93
    %v162 = vpack.c.bf16 %v96, %v94
    %v163 = vpack.c.bf16 %v99, %v97
    %v164 = vpack.c.bf16 %v100, %v98
    %v165 = vpack.c.bf16 %v103, %v101
    %v166 = vpack.c.bf16 %v104, %v102
    %v167 = vpack.c.bf16 %v107, %v105
    %v168 = vpack.c.bf16 %v108, %v106
    %v169 = vpack.c.bf16 %v111, %v109
    %v170 = vpack.c.bf16 %v112, %v110
    %v171 = vpack.c.bf16 %v115, %v113
    %v172 = vpack.c.bf16 %v116, %v114
    %v173 = vpack.c.bf16 %v119, %v117
    %v174 = vpack.c.bf16 %v120, %v118
    %175 = vmatprep.subr.bf16.mxu0 %v142
    %176 = vmatpush1.bf16.msra.mxu0 %v141
    %177 = vmatprep.subr.bf16.mxu0 %v140
    %178 = vmatpush1.bf16.msra.mxu0 %v139
    %179 = vmatprep.subr.bf16.mxu0 %v138
    %180 = vmatpush1.bf16.msra.mxu0 %v137
    %181 = vmatprep.subr.bf16.mxu0 %v136
    %182 = vmatpush1.bf16.msra.mxu0 %v135
    %183 = vmatprep.subr.bf16.mxu0 %v134
    %184 = vmatpush1.bf16.msra.mxu0 %v133
    %185 = vmatprep.subr.bf16.mxu0 %v132
    %186 = vmatpush1.bf16.msra.mxu0 %v131
    %187 = vmatprep.subr.bf16.mxu0 %v130
    %188 = vmatpush1.bf16.msra.mxu0 %v129
    %189 = vmatprep.subr.bf16.mxu0 %v128
    %190 = vmatpush1.bf16.msra.mxu0 %v127
    %191 = vmatprep.subr.bf16.mxu0 %v158
    %192 = vmatpush2.bf16.msra.mxu0 %v157
    %193 = vmatprep.subr.bf16.mxu0 %v156
    %194 = vmatpush2.bf16.msra.mxu0 %v155
    %195 = vmatprep.subr.bf16.mxu0 %v154
    %196 = vmatpush2.bf16.msra.mxu0 %v153
    %197 = vmatprep.subr.bf16.mxu0 %v152
    %198 = vmatpush2.bf16.msra.mxu0 %v151
    %199 = vmatprep.subr.bf16.mxu0 %v150
    %200 = vmatpush2.bf16.msra.mxu0 %v149
    %201 = vmatprep.subr.bf16.mxu0 %v148
    %202 = vmatpush2.bf16.msra.mxu0 %v147
    %203 = vmatprep.subr.bf16.mxu0 %v146
    %204 = vmatpush2.bf16.msra.mxu0 %v145
    %205 = vmatprep.subr.bf16.mxu0 %v144
    %206 = vmatpush2.bf16.msra.mxu0 %v143
    %207 = vmatprep.mubr.bf16.mxu0 %v122
    %208 = vmatmul.mubr.bf16.gmra.mxu0 %v121
    %v209 = vpop.f32.mrf.mxu0
    %v210 = vadd.f32 0.0, %v209
    %v211 = vpop.f32.mrf.mxu0
    %v212 = vadd.f32 0.0, %v211
    %v213 = vpop.f32.mrf.mxu0
    %v214 = vadd.f32 0.0, %v213
    %v215 = vpop.f32.mrf.mxu0
    %v216 = vadd.f32 0.0, %v215
    %217 = vmatprep.mubr.bf16.mxu0 %v125
    %218 = vmatmul.mubr.bf16.gmra.mxu0 %v124
    %v219 = vpop.f32.mrf.mxu0
    %v220 = vadd.f32 0.0, %v219
    %v221 = vpop.f32.mrf.mxu0
    %v222 = vadd.f32 0.0, %v221
    %v223 = vpop.f32.mrf.mxu0
    %v224 = vadd.f32 0.0, %v223
    %v225 = vpop.f32.mrf.mxu0
    %v226 = vadd.f32 0.0, %v225
    %227 = vdwg.mxu0
    %228 = vmatprep.subr.bf16.mxu0 %v174
    %229 = vmatpush1.bf16.msra.mxu0 %v173
    %230 = vmatprep.subr.bf16.mxu0 %v172
    %231 = vmatpush1.bf16.msra.mxu0 %v171
    %232 = vmatprep.subr.bf16.mxu0 %v170
    %233 = vmatpush1.bf16.msra.mxu0 %v169
    %234 = vmatprep.subr.bf16.mxu0 %v168
    %235 = vmatpush1.bf16.msra.mxu0 %v167
    %236 = vmatprep.subr.bf16.mxu0 %v166
    %237 = vmatpush1.bf16.msra.mxu0 %v165
    %238 = vmatprep.subr.bf16.mxu0 %v164
    %239 = vmatpush1.bf16.msra.mxu0 %v163
    %240 = vmatprep.subr.bf16.mxu0 %v162
    %241 = vmatpush1.bf16.msra.mxu0 %v161
    %242 = vmatprep.subr.bf16.mxu0 %v160
    %243 = vmatpush1.bf16.msra.mxu0 %v159
    %244 = vmatprep.subr.bf16.mxu0 0
    %245 = vmatpush2.bf16.msra.mxu0 0
    %246 = vmatprep.subr.bf16.mxu0 0
    %247 = vmatpush2.bf16.msra.mxu0 0
    %248 = vmatprep.subr.bf16.mxu0 0
    %249 = vmatpush2.bf16.msra.mxu0 0
    %250 = vmatprep.subr.bf16.mxu0 0
    %251 = vmatpush2.bf16.msra.mxu0 0
    %252 = vmatprep.subr.bf16.mxu0 0
    %253 = vmatpush2.bf16.msra.mxu0 0
    %254 = vmatprep.subr.bf16.mxu0 0
    %255 = vmatpush2.bf16.msra.mxu0 0
    %256 = vmatprep.subr.bf16.mxu0 0
    %257 = vmatpush2.bf16.msra.mxu0 0
    %258 = vmatprep.subr.bf16.mxu0 0
    %259 = vmatpush2.bf16.msra.mxu0 0
    %260 = vmatprep.mubr.bf16.mxu0 0
    %261 = vmatmul.mubr.bf16.gmra.mxu0 %v123
    %v262 = vpop.f32.mrf.mxu0
    %v263 = vadd.f32 %v210, %v262
    %v264 = vpop.f32.mrf.mxu0
    %v265 = vadd.f32 %v212, %v264
    %v266 = vpop.f32.mrf.mxu0
    %v267 = vadd.f32 %v214, %v266
    %v268 = vpop.f32.mrf.mxu0
    %v269 = vadd.f32 %v216, %v268
    %270 = vmatprep.mubr.bf16.mxu0 0
    %271 = vmatmul.mubr.bf16.gmra.mxu0 %v126
    %v272 = vpop.f32.mrf.mxu0
    %v273 = vadd.f32 %v220, %v272
    %v274 = vpop.f32.mrf.mxu0
    %v275 = vadd.f32 %v222, %v274
    %v276 = vpop.f32.mrf.mxu0
    %v277 = vadd.f32 %v224, %v276
    %v278 = vpop.f32.mrf.mxu0
    %v279 = vadd.f32 %v226, %v278
    %280 = vdwg.mxu0
    %v281 = vmul.f32 %v263, 0.05103104
    %v282 = vmul.f32 %v267, 0.05103104
    %v283 = vmul.f32 %v273, 0.05103104
    %v284 = vmul.f32 %v277, 0.05103104
    %v285 = vpack.c.bf16 %v282, %v281
    %v286 = vpack.c.bf16 %v284, %v283
    %v287 = vpack.c.bf16 %v267, %v263
    %v288 = vpack.c.bf16 %v277, %v273
    %290 = vrot.lane.b32.xlu0 %v287, 64
    %v291 = vpop.permute.xlu0 %290
    %vm292 = vcmask 523264
    %v294 = vsel %vm292, %v285, 0
    %v297 = vsel %vm292, %v291, 0
    %299 = vmatprep.subr.bf16.mxu0 0
    %300 = vmatpush1.bf16.xpose.msra.mxu0 0
    %301 = vmatprep.subr.bf16.mxu0 0
    %302 = vmatpush1.bf16.xpose.msra.mxu0 0
    %303 = vmatprep.subr.bf16.mxu0 0
    %304 = vmatpush1.bf16.xpose.msra.mxu0 0
    %305 = vmatprep.subr.bf16.mxu0 0
    %306 = vmatpush1.bf16.xpose.msra.mxu0 0
    %307 = vmatprep.subr.bf16.mxu0 0
    %308 = vmatpush1.bf16.xpose.msra.mxu0 0
    %309 = vmatprep.subr.bf16.mxu0 0
    %310 = vmatpush1.bf16.xpose.msra.mxu0 0
    %311 = vmatprep.subr.bf16.mxu0 0
    %312 = vmatpush1.bf16.xpose.msra.mxu0 0
    %313 = vmatprep.subr.bf16.mxu0 0
    %314 = vmatpush1.bf16.xpose.msra.mxu0 %v297
    %315 = vmatprep.subr.bf16.mxu0 0
    %316 = vmatpush2.bf16.xpose.msra.mxu0 0
    %317 = vmatprep.subr.bf16.mxu0 0
    %318 = vmatpush2.bf16.xpose.msra.mxu0 0
    %319 = vmatprep.subr.bf16.mxu0 0
    %320 = vmatpush2.bf16.xpose.msra.mxu0 0
    %321 = vmatprep.subr.bf16.mxu0 0
    %322 = vmatpush2.bf16.xpose.msra.mxu0 0
    %323 = vmatprep.subr.bf16.mxu0 0
    %324 = vmatpush2.bf16.xpose.msra.mxu0 0
    %325 = vmatprep.subr.bf16.mxu0 0
    %326 = vmatpush2.bf16.xpose.msra.mxu0 0
    %327 = vmatprep.subr.bf16.mxu0 0
    %328 = vmatpush2.bf16.xpose.msra.mxu0 0
    %329 = vmatprep.subr.bf16.mxu0 0
    %330 = vmatpush2.bf16.xpose.msra.mxu0 0
    %331 = vmatprep.mubr.bf16.mxu0 0
    %332 = vmatmul.mubr.bf16.gmra.mxu0 %v294
    %v333 = vpop.f32.mrf.mxu0
    %v334 = vadd.f32 0.0, %v333
    %v335 = vpop.f32.mrf.mxu0
    %v336 = vpop.f32.mrf.mxu0
    %v337 = vadd.f32 0.0, %v336
    %v338 = vpop.f32.mrf.mxu0
    %339 = vdwg.mxu0
    %341 = vrot.lane.b32.xlu0 %v288, 64
    %v342 = vpop.permute.xlu0 %341
    %v344 = vsel %vm292, %v286, 0
    %v347 = vsel %vm292, %v342, 0
    %349 = vmatprep.subr.bf16.mxu0 0
    %350 = vmatpush1.bf16.xpose.msra.mxu0 0
    %351 = vmatprep.subr.bf16.mxu0 0
    %352 = vmatpush1.bf16.xpose.msra.mxu0 0
    %353 = vmatprep.subr.bf16.mxu0 0
    %354 = vmatpush1.bf16.xpose.msra.mxu0 0
    %355 = vmatprep.subr.bf16.mxu0 0
    %356 = vmatpush1.bf16.xpose.msra.mxu0 0
    %357 = vmatprep.subr.bf16.mxu0 0
    %358 = vmatpush1.bf16.xpose.msra.mxu0 0
    %359 = vmatprep.subr.bf16.mxu0 0
    %360 = vmatpush1.bf16.xpose.msra.mxu0 0
    %361 = vmatprep.subr.bf16.mxu0 0
    %362 = vmatpush1.bf16.xpose.msra.mxu0 0
    %363 = vmatprep.subr.bf16.mxu0 0
    %364 = vmatpush1.bf16.xpose.msra.mxu0 %v347
    %365 = vmatprep.subr.bf16.mxu0 0
    %366 = vmatpush2.bf16.xpose.msra.mxu0 0
    %367 = vmatprep.subr.bf16.mxu0 0
    %368 = vmatpush2.bf16.xpose.msra.mxu0 0
    %369 = vmatprep.subr.bf16.mxu0 0
    %370 = vmatpush2.bf16.xpose.msra.mxu0 0
    %371 = vmatprep.subr.bf16.mxu0 0
    %372 = vmatpush2.bf16.xpose.msra.mxu0 0
    %373 = vmatprep.subr.bf16.mxu0 0
    %374 = vmatpush2.bf16.xpose.msra.mxu0 0
    %375 = vmatprep.subr.bf16.mxu0 0
    %376 = vmatpush2.bf16.xpose.msra.mxu0 0
    %377 = vmatprep.subr.bf16.mxu0 0
    %378 = vmatpush2.bf16.xpose.msra.mxu0 0
    %379 = vmatprep.subr.bf16.mxu0 0
    %380 = vmatpush2.bf16.xpose.msra.mxu0 0
    %381 = vmatprep.mubr.bf16.mxu0 0
    %382 = vmatmul.mubr.bf16.gmra.mxu0 %v344
    %v383 = vpop.f32.mrf.mxu0
    %v384 = vadd.f32 0.0, %v383
    %v385 = vpop.f32.mrf.mxu0
    %v386 = vpop.f32.mrf.mxu0
    %v387 = vadd.f32 0.0, %v386
    %v388 = vpop.f32.mrf.mxu0
    %389 = vdwg.mxu0
    %v390 = vlaneseq
    %v391 = vshrl.u32 %v390, 7
    %v392 = vadd.s32 %v391, 8
    %v393 = vlaneseq
    %v394 = vand.u32 %v393, 127
    %vm395 = vcmp.le.s32.totalorder %v394, %v391
    %vm396 = vcmp.le.s32.totalorder %v394, %v392
    %v397 = vsel %vm395, %v334, -inf
    %v398 = vsel %vm396, %v337, -inf
    %v399 = vsel %vm395, %v384, -inf
    %v400 = vsel %vm396, %v387, -inf
    %vm401 = vcmask 130048
    %v402 = vsel %vm401, %v397, -inf
    %403 = vmax.xlane.f32.xlu0 %v402
    %v404 = vpop.xlane.xlu0 %403
    %v405 = vsel %vm401, %v398, -inf
    %406 = vmax.xlane.f32.xlu0 %v405
    %v407 = vpop.xlane.xlu0 %406
    %v408 = vsel %vm401, %v399, -inf
    %409 = vmax.xlane.f32.xlu0 %v408
    %v410 = vpop.xlane.xlu0 %409
    %v411 = vsel %vm401, %v400, -inf
    %412 = vmax.xlane.f32.xlu0 %v411
    %v413 = vpop.xlane.xlu0 %412
    %v414 = vsub.f32 %v397, %v404
    %v415 = vsub.f32 %v398, %v407
    %v416 = vsub.f32 %v399, %v410
    %v417 = vsub.f32 %v400, %v413
    %v418 = vmul.f32 %v414, 1.442695
    %v419 = vpow.pop %v418
    %v420 = vmul.f32 %v415, 1.442695
    %v421 = vpow.pop %v420
    %v422 = vmul.f32 %v416, 1.442695
    %v423 = vpow.pop %v422
    %v424 = vmul.f32 %v417, 1.442695
    %v425 = vpow.pop %v424
    %v426 = vsel %vm401, %v419, 0.0
    %427 = vadd.xlane.f32.xlu0 %v426
    %v428 = vpop.xlane.xlu0 %427
    %v429 = vsel %vm401, %v421, 0.0
    %430 = vadd.xlane.f32.xlu0 %v429
    %v431 = vpop.xlane.xlu0 %430
    %v432 = vsel %vm401, %v423, 0.0
    %433 = vadd.xlane.f32.xlu0 %v432
    %v434 = vpop.xlane.xlu0 %433
    %v435 = vsel %vm401, %v425, 0.0
    %436 = vadd.xlane.f32.xlu0 %v435
    %v437 = vpop.xlane.xlu0 %436
    %v438 = vrcp.pop %v428
    %v439 = vrcp.pop %v431
    %v440 = vrcp.pop %v434
    %v441 = vrcp.pop %v437
    %v442 = vmul.f32 %v419, %v438
    %v443 = vmul.f32 %v421, %v439
    %v444 = vmul.f32 %v423, %v440
    %v445 = vmul.f32 %v425, %v441
    %v446 = vpack.c.bf16 %v443, %v442
    %v447 = vpack.c.bf16 %v445, %v444
    %v448 = vpack.c.bf16 %v269, %v265
    %v449 = vpack.c.bf16 %v279, %v275
    %v451 = vsel %vm401, %v446, 0
    %453 = vmatprep.subr.bf16.mxu0 0
    %454 = vmatpush1.bf16.msra.mxu0 0
    %455 = vmatprep.subr.bf16.mxu0 0
    %456 = vmatpush1.bf16.msra.mxu0 0
    %457 = vmatprep.subr.bf16.mxu0 0
    %458 = vmatpush1.bf16.msra.mxu0 0
    %459 = vmatprep.subr.bf16.mxu0 0
    %460 = vmatpush1.bf16.msra.mxu0 0
    %461 = vmatprep.subr.bf16.mxu0 0
    %462 = vmatpush1.bf16.msra.mxu0 0
    %463 = vmatprep.subr.bf16.mxu0 0
    %464 = vmatpush1.bf16.msra.mxu0 0
    %465 = vmatprep.subr.bf16.mxu0 0
    %466 = vmatpush1.bf16.msra.mxu0 0
    %467 = vmatprep.subr.bf16.mxu0 0
    %468 = vmatpush1.bf16.msra.mxu0 %v448
    %469 = vmatprep.subr.bf16.mxu0 0
    %470 = vmatpush2.bf16.msra.mxu0 0
    %471 = vmatprep.subr.bf16.mxu0 0
    %472 = vmatpush2.bf16.msra.mxu0 0
    %473 = vmatprep.subr.bf16.mxu0 0
    %474 = vmatpush2.bf16.msra.mxu0 0
    %475 = vmatprep.subr.bf16.mxu0 0
    %476 = vmatpush2.bf16.msra.mxu0 0
    %477 = vmatprep.subr.bf16.mxu0 0
    %478 = vmatpush2.bf16.msra.mxu0 0
    %479 = vmatprep.subr.bf16.mxu0 0
    %480 = vmatpush2.bf16.msra.mxu0 0
    %481 = vmatprep.subr.bf16.mxu0 0
    %482 = vmatpush2.bf16.msra.mxu0 0
    %483 = vmatprep.subr.bf16.mxu0 0
    %484 = vmatpush2.bf16.msra.mxu0 0
    %485 = vmatprep.mubr.bf16.mxu0 0
    %486 = vmatmul.mubr.bf16.gmra.mxu0 %v451
    %v487 = vpop.f32.mrf.mxu0
    %v488 = vadd.f32 0.0, %v487
    %v489 = vpop.f32.mrf.mxu0
    %v490 = vpop.f32.mrf.mxu0
    %v491 = vadd.f32 0.0, %v490
    %v492 = vpop.f32.mrf.mxu0
    %493 = vdwg.mxu0
    %v495 = vsel %vm401, %v447, 0
    %497 = vmatprep.subr.bf16.mxu0 0
    %498 = vmatpush1.bf16.msra.mxu0 0
    %499 = vmatprep.subr.bf16.mxu0 0
    %500 = vmatpush1.bf16.msra.mxu0 0
    %501 = vmatprep.subr.bf16.mxu0 0
    %502 = vmatpush1.bf16.msra.mxu0 0
    %503 = vmatprep.subr.bf16.mxu0 0
    %504 = vmatpush1.bf16.msra.mxu0 0
    %505 = vmatprep.subr.bf16.mxu0 0
    %506 = vmatpush1.bf16.msra.mxu0 0
    %507 = vmatprep.subr.bf16.mxu0 0
    %508 = vmatpush1.bf16.msra.mxu0 0
    %509 = vmatprep.subr.bf16.mxu0 0
    %510 = vmatpush1.bf16.msra.mxu0 0
    %511 = vmatprep.subr.bf16.mxu0 0
    %512 = vmatpush1.bf16.msra.mxu0 %v449
    %513 = vmatprep.subr.bf16.mxu0 0
    %514 = vmatpush2.bf16.msra.mxu0 0
    %515 = vmatprep.subr.bf16.mxu0 0
    %516 = vmatpush2.bf16.msra.mxu0 0
    %517 = vmatprep.subr.bf16.mxu0 0
    %518 = vmatpush2.bf16.msra.mxu0 0
    %519 = vmatprep.subr.bf16.mxu0 0
    %520 = vmatpush2.bf16.msra.mxu0 0
    %521 = vmatprep.subr.bf16.mxu0 0
    %522 = vmatpush2.bf16.msra.mxu0 0
    %523 = vmatprep.subr.bf16.mxu0 0
    %524 = vmatpush2.bf16.msra.mxu0 0
    %525 = vmatprep.subr.bf16.mxu0 0
    %526 = vmatpush2.bf16.msra.mxu0 0
    %527 = vmatprep.subr.bf16.mxu0 0
    %528 = vmatpush2.bf16.msra.mxu0 0
    %529 = vmatprep.mubr.bf16.mxu0 0
    %530 = vmatmul.mubr.bf16.gmra.mxu0 %v495
    %v531 = vpop.f32.mrf.mxu0
    %v532 = vadd.f32 0.0, %v531
    %v533 = vpop.f32.mrf.mxu0
    %v534 = vpop.f32.mrf.mxu0
    %v535 = vadd.f32 0.0, %v534
    %v536 = vpop.f32.mrf.mxu0
    %537 = vdwg.mxu0
    %538 = vst.msk [vmem:[#allocation2] sm:$0xff] %vm292, %v488
    %539 = vst.msk [vmem:[#allocation2 + $0x8] sm:$0xff] %vm292, %v491
    %540 = vst.msk [vmem:[#allocation2 + $0x10] sm:$0xff] %vm292, %v532
    %541 = vst.msk [vmem:[#allocation2 + $0x18] sm:$0xff] %vm292, %v535
    // Predicated region
    $region10: #{tpu_custom_call.1} parent=1 // pred_check
      _
    $region11: #{tpu_custom_call.1} parent=1 // pred_check_branch
      %543 = sbr.rel (0) target = $region13
    $region12: #{tpu_custom_call.1} parent=1 // pred_region
      %s545 = ssub.s32 512, 512
      %546 = vsyncadd [#allocation3], %s545
      %s547 = sshll.u32 [#allocation2], 4
      %s548 = int_to_ptr.vmem [resolvable:$true] %s547
      %553 = dma.vmem_to_hbm [thread:$0]  %s548, 512, %s2, [#allocation3], 128, 128, 8
    $region13: #{tpu_custom_call.1} parent=1 // pred_fallthru
      _
    // Predicated region
    $region14: #{tpu_custom_call.1} parent=1 // pred_check
      _
    $region15: #{tpu_custom_call.1} parent=1 // pred_check_branch
      %555 = sbr.rel (0) target = $region17
    $region16: #{tpu_custom_call.1} parent=1 // pred_region
      %556 = dma.done [#allocation3], 512
    $region17: #{tpu_custom_call.1} parent=1 // pred_fallthru
      _
    %557 = vsyncpa [#allocation3], 1

</llo_original>
